<compile_context>
chip_gen: v5e
topology: v5e:2x2
jax: 0.10.0
libtpu: 0.0.40
codegen_flags: <defaults>
</compile_context>

<pallas_src>
import functools

import jax
import jax.numpy as jnp
from jax.experimental import pallas as pl
from jax.experimental.pallas import tpu as pltpu

_LANE = 128
_SUBLANE = 8


def _cb_loss_kernel(x_ref, t_ref, out_ref, wsum_ref, lsum_ref,
                    *, w0, w1, w2, w3, scale):
    step = pl.program_id(0)

    @pl.when(step == 0)
    def _init():
        wsum_ref[...] = jnp.zeros_like(wsum_ref)
        lsum_ref[...] = jnp.zeros_like(lsum_ref)

    x = x_ref[...].astype(jnp.float32)   # (4, TS, 128): classes on leading dim
    t = t_ref[...]                       # (TS, 128) int32; padded slots hold -1

    # Static leading-dim slices -> dense (TS, 128) tiles, full vreg occupancy.
    x0, x1, x2, x3 = x[0], x[1], x[2], x[3]

    # log_softmax over the class axis: VPU max/add + EUP exp/log only.
    m = jnp.maximum(jnp.maximum(x0, x1), jnp.maximum(x2, x3))
    lse = m + jnp.log(jnp.exp(x0 - m) + jnp.exp(x1 - m)
                      + jnp.exp(x2 - m) + jnp.exp(x3 - m))

    is0 = t == 0
    is1 = t == 1
    is2 = t == 2
    is3 = t == 3
    valid = is0 | is1 | is2 | is3        # padding labels (-1) contribute zero

    # gather log p(target) and the (unnormalized) class-balance weight with
    # compare/select chains (no real gather needed for 4 classes).
    sel = jnp.where(is0, x0, jnp.where(is1, x1, jnp.where(is2, x2, x3)))
    logpt = jnp.where(valid, sel - lse, 0.0)
    w = jnp.where(is0, w0,
        jnp.where(is1, w1,
        jnp.where(is2, w2,
        jnp.where(is3, w3, 0.0))))

    # cheap per-step sublane reduce into lane-partial accumulators
    wsum_ref[...] += jnp.sum(w, axis=0, keepdims=True)      # (1, 128)
    lsum_ref[...] += jnp.sum(logpt, axis=0, keepdims=True)  # (1, 128)

    @pl.when(step == pl.num_programs(0) - 1)
    def _finalize():
        # mean_{i,j}(-w_i*logpt_j) == -(sum w_unnorm)(sum logpt)/(sum_*B^2)
        wtot = jnp.sum(wsum_ref[...], axis=1, keepdims=True)  # (1, 1)
        ltot = jnp.sum(lsum_ref[...], axis=1, keepdims=True)  # (1, 1)
        out_ref[...] = -(wtot * ltot) * scale


def class_balance_loss(x, target, *, beta, n, v, s, f, block_rows=256):
    """x: (B, 4) float logits (any float dtype); target: (B,) int labels 0..3."""
    B, C = x.shape
    assert C == 4, "ClassBalanceLoss is defined for 4 classes (N, V, S, F)"

    # constants folded at trace time; one fused scale, no in-kernel divides
    w0 = (1.0 - beta) / (1.0 - beta ** n)
    w1 = (1.0 - beta) / (1.0 - beta ** v)
    w2 = (1.0 - beta) / (1.0 - beta ** s)
    w3 = (1.0 - beta) / (1.0 - beta ** f)
    scale = 1.0 / ((w0 + w1 + w2 + w3) * float(B) * float(B))

    # Lane-dense, sublane-dense layout: batch -> (rows, 128) with classes on a
    # small leading axis.  Keep the native dtype for the HBM->VMEM DMA.
    rows = pl.cdiv(B, _LANE)                                  # 128-sample rows
    rows8 = pl.cdiv(rows, _SUBLANE) * _SUBLANE
    ts = max(_SUBLANE, min(pl.cdiv(int(block_rows), _SUBLANE) * _SUBLANE, rows8))
    rows_p = pl.cdiv(rows, ts) * ts                           # multiple of ts
    bp = rows_p * _LANE

    xt = x.T                                                  # (4, B)
    t = target.astype(jnp.int32).reshape(1, B)                # (1, B)
    if bp != B:   # pad; label -1 => zero weight and zero logpt contribution
        xt = jnp.pad(xt, ((0, 0), (0, bp - B)))
        t = jnp.pad(t, ((0, 0), (0, bp - B)), constant_values=-1)
    x3d = xt.reshape(C, rows_p, _LANE)                        # (4, rows_p, 128)
    t2d = t.reshape(rows_p, _LANE)                            # (rows_p, 128)

    kernel = functools.partial(
        _cb_loss_kernel,
        w0=float(w0), w1=float(w1), w2=float(w2), w3=float(w3),
        scale=float(scale),
    )
    out = pl.pallas_call(
        kernel,
        out_shape=jax.ShapeDtypeStruct((1, 1), jnp.float32),
        grid=(rows_p // ts,),
        in_specs=[
            pl.BlockSpec((C, ts, _LANE), lambda i: (0, i, 0)),  # logits block
            pl.BlockSpec((ts, _LANE), lambda i: (i, 0)),        # labels block
        ],
        out_specs=pl.BlockSpec((1, 1), lambda i: (0, 0)),       # resident scalar
        scratch_shapes=[pltpu.VMEM((1, _LANE), jnp.float32),    # lane-partial sum of w
                        pltpu.VMEM((1, _LANE), jnp.float32)],   # lane-partial sum of logpt
        compiler_params=pltpu.CompilerParams(
            dimension_semantics=("arbitrary",)),
    )(x3d, t2d)
    return out[0, 0]


if __name__ == "__main__":
    # Deterministic "module parameters" (scalars from __init__).
    beta, num_n, num_v, num_s, num_f = 0.999, 1000, 300, 120, 40

    key = jax.random.PRNGKey(0)
    kx, kt = jax.random.split(key)
    B, C = 8, 4
    x = jax.random.normal(kx, (B, C), dtype=jnp.float32)
    target = jax.random.randint(kt, (B,), 0, 4, dtype=jnp.int32)

    loss = class_balance_loss(x, target, beta=beta, n=num_n, v=num_v,
                              s=num_s, f=num_f)
    loss = jax.block_until_ready(loss)

    # pure-JAX reference (same math as the PyTorch module, incl. (B,B) mean)
    logp = jax.nn.log_softmax(x, axis=1)
    logpt = jnp.take_along_axis(logp, target.reshape(-1, 1), axis=1).reshape(-1)
    counts = jnp.array([num_n, num_v, num_s, num_f], jnp.float32)
    w_ref = (1.0 - beta) / (1.0 - beta ** counts[target])
    sum_ref = jnp.sum((1.0 - beta) / (1.0 - beta ** counts))
    ref = jnp.mean(-(w_ref / sum_ref).reshape(-1, 1) * logpt.reshape(1, -1))

    assert jnp.allclose(loss, ref, rtol=1e-4, atol=1e-6), (loss, ref)
    print("KERNEL_OK")
</pallas_src>

<mosaic_0001>
module attributes {stable_mosaic.version = 11 : i64} {
  func.func @_cb_loss_kernel(%arg0: i32, %arg1: memref<4x8x128xf32, #tpu.memory_space<vmem>>, %arg2: memref<8x128xi32, #tpu.memory_space<vmem>>, %arg3: memref<1x1xf32, #tpu.memory_space<vmem>>, %arg4: memref<1x128xf32, #tpu.memory_space<vmem>>, %arg5: memref<1x128xf32, #tpu.memory_space<vmem>>) attributes {dimension_semantics = [#tpu.dimension_semantics<arbitrary>], iteration_bounds = array<i64: 1>, scalar_prefetch = 0 : i64, scratch_operands = 2 : i64, tpu.core_type = #tpu.core_type<tc>, window_params = [{transform_indices = @transform_0, window_bounds = array<i64: 4, 8, 128>}, {transform_indices = @transform_1, window_bounds = array<i64: 8, 128>}, {pipeline_mode = #tpu.pipeline_mode<synchronous>, transform_indices = @transform_2, window_bounds = array<i64: 1, 1>}]} {
    %c0_i32 = arith.constant 0 : i32
    %0 = arith.cmpi eq, %arg0, %c0_i32 : i32
    %1 = arith.extui %0 : i1 to i32
    %c0_i32_0 = arith.constant 0 : i32
    %2 = arith.cmpi ne, %1, %c0_i32_0 : i32
    scf.if %2 {
      %cst_23 = arith.constant 0.000000e+00 : f32
      %68 = vector.broadcast %cst_23 : f32 to vector<1x128xf32>
      %c0_24 = arith.constant 0 : index
      %c0_25 = arith.constant 0 : index
      %69 = vector.load %arg4[%c0_24, %c0_25] : memref<1x128xf32, #tpu.memory_space<vmem>>, vector<1x128xf32>
      tpu.vector_store %arg4[%c0_24, %c0_25], %68 {strides = array<i32>} : memref<1x128xf32, #tpu.memory_space<vmem>>, vector<1x128xf32>,
      %cst_26 = arith.constant 0.000000e+00 : f32
      %70 = vector.broadcast %cst_26 : f32 to vector<1x128xf32>
      %c0_27 = arith.constant 0 : index
      %c0_28 = arith.constant 0 : index
      %71 = vector.load %arg5[%c0_27, %c0_28] : memref<1x128xf32, #tpu.memory_space<vmem>>, vector<1x128xf32>
      tpu.vector_store %arg5[%c0_27, %c0_28], %70 {strides = array<i32>} : memref<1x128xf32, #tpu.memory_space<vmem>>, vector<1x128xf32>,
    } else {
    }
    %c0 = arith.constant 0 : index
    %c0_1 = arith.constant 0 : index
    %c0_2 = arith.constant 0 : index
    %3 = vector.load %arg1[%c0, %c0_1, %c0_2] : memref<4x8x128xf32, #tpu.memory_space<vmem>>, vector<4x8x128xf32>
    %c0_3 = arith.constant 0 : index
    %c0_4 = arith.constant 0 : index
    %4 = vector.load %arg2[%c0_3, %c0_4] : memref<8x128xi32, #tpu.memory_space<vmem>>, vector<8x128xi32>
    %5 = vector.extract_strided_slice %3 {offsets = [0, 0, 0], sizes = [1, 8, 128], strides = [1, 1, 1]} : vector<4x8x128xf32> to vector<1x8x128xf32>
    %6 = vector.shape_cast %5 : vector<1x8x128xf32> to vector<8x128xf32>
    %7 = vector.extract_strided_slice %3 {offsets = [1, 0, 0], sizes = [1, 8, 128], strides = [1, 1, 1]} : vector<4x8x128xf32> to vector<1x8x128xf32>
    %8 = vector.shape_cast %7 : vector<1x8x128xf32> to vector<8x128xf32>
    %9 = vector.extract_strided_slice %3 {offsets = [2, 0, 0], sizes = [1, 8, 128], strides = [1, 1, 1]} : vector<4x8x128xf32> to vector<1x8x128xf32>
    %10 = vector.shape_cast %9 : vector<1x8x128xf32> to vector<8x128xf32>
    %11 = vector.extract_strided_slice %3 {offsets = [3, 0, 0], sizes = [1, 8, 128], strides = [1, 1, 1]} : vector<4x8x128xf32> to vector<1x8x128xf32>
    %12 = vector.shape_cast %11 : vector<1x8x128xf32> to vector<8x128xf32>
    %13 = arith.maximumf %6, %8 : vector<8x128xf32>
    %14 = arith.maximumf %10, %12 : vector<8x128xf32>
    %15 = arith.maximumf %13, %14 : vector<8x128xf32>
    %16 = arith.subf %6, %15 : vector<8x128xf32>
    %17 = math.exp %16 : vector<8x128xf32>
    %18 = arith.subf %8, %15 : vector<8x128xf32>
    %19 = math.exp %18 : vector<8x128xf32>
    %20 = arith.addf %17, %19 : vector<8x128xf32>
    %21 = arith.subf %10, %15 : vector<8x128xf32>
    %22 = math.exp %21 : vector<8x128xf32>
    %23 = arith.addf %20, %22 : vector<8x128xf32>
    %24 = arith.subf %12, %15 : vector<8x128xf32>
    %25 = math.exp %24 : vector<8x128xf32>
    %26 = arith.addf %23, %25 : vector<8x128xf32>
    %27 = math.log %26 : vector<8x128xf32>
    %28 = arith.addf %15, %27 : vector<8x128xf32>
    %c0_i32_5 = arith.constant 0 : i32
    %29 = vector.broadcast %c0_i32_5 : i32 to vector<8x128xi32>
    %30 = arith.cmpi eq, %4, %29 : vector<8x128xi32>
    %c1_i32 = arith.constant 1 : i32
    %31 = vector.broadcast %c1_i32 : i32 to vector<8x128xi32>
    %32 = arith.cmpi eq, %4, %31 : vector<8x128xi32>
    %c2_i32 = arith.constant 2 : i32
    %33 = vector.broadcast %c2_i32 : i32 to vector<8x128xi32>
    %34 = arith.cmpi eq, %4, %33 : vector<8x128xi32>
    %c3_i32 = arith.constant 3 : i32
    %35 = vector.broadcast %c3_i32 : i32 to vector<8x128xi32>
    %36 = arith.cmpi eq, %4, %35 : vector<8x128xi32>
    %37 = arith.ori %30, %32 : vector<8x128xi1>
    %38 = arith.ori %37, %34 : vector<8x128xi1>
    %39 = arith.ori %38, %36 : vector<8x128xi1>
    %40 = arith.select %34, %10, %12 : vector<8x128xi1>, vector<8x128xf32>
    %41 = arith.select %32, %8, %40 : vector<8x128xi1>, vector<8x128xf32>
    %42 = arith.select %30, %6, %41 : vector<8x128xi1>, vector<8x128xf32>
    %43 = arith.subf %42, %28 : vector<8x128xf32>
    %cst = arith.constant 0.000000e+00 : f32
    %44 = vector.broadcast %cst : f32 to vector<8x128xf32>
    %45 = arith.select %39, %43, %44 : vector<8x128xi1>, vector<8x128xf32>
    %cst_6 = arith.constant 0.0254908334 : f32
    %cst_7 = arith.constant 0.000000e+00 : f32
    %46 = vector.broadcast %cst_6 : f32 to vector<8x128xf32>
    %47 = vector.broadcast %cst_7 : f32 to vector<8x128xf32>
    %48 = arith.select %36, %46, %47 : vector<8x128xi1>, vector<8x128xf32>
    %cst_8 = arith.constant 0.00883916859 : f32
    %49 = vector.broadcast %cst_8 : f32 to vector<8x128xf32>
    %50 = arith.select %34, %49, %48 : vector<8x128xi1>, vector<8x128xf32>
    %cst_9 = arith.constant 0.00385664147 : f32
    %51 = vector.broadcast %cst_9 : f32 to vector<8x128xf32>
    %52 = arith.select %32, %51, %50 : vector<8x128xi1>, vector<8x128xf32>
    %cst_10 = arith.constant 0.00158151635 : f32
    %53 = vector.broadcast %cst_10 : f32 to vector<8x128xf32>
    %54 = arith.select %30, %53, %52 : vector<8x128xi1>, vector<8x128xf32>
    %c0_11 = arith.constant 0 : index
    %c0_12 = arith.constant 0 : index
    %55 = vector.load %arg4[%c0_11, %c0_12] : memref<1x128xf32, #tpu.memory_space<vmem>>, vector<1x128xf32>
    %cst_13 = arith.constant dense<0.000000e+00> : vector<128xf32>
    %56 = vector.multi_reduction <add>, %54, %cst_13 [0] : vector<8x128xf32> to vector<128xf32>
    %57 = vector.shape_cast %56 : vector<128xf32> to vector<1x128xf32>
    %58 = arith.addf %55, %57 : vector<1x128xf32>
    %c0_14 = arith.constant 0 : index
    %c0_15 = arith.constant 0 : index
    %59 = vector.load %arg4[%c0_14, %c0_15] : memref<1x128xf32, #tpu.memory_space<vmem>>, vector<1x128xf32>
    tpu.vector_store %arg4[%c0_14, %c0_15], %58 {strides = array<i32>} : memref<1x128xf32, #tpu.memory_space<vmem>>, vector<1x128xf32>,
    %c0_16 = arith.constant 0 : index
    %c0_17 = arith.constant 0 : index
    %60 = vector.load %arg5[%c0_16, %c0_17] : memref<1x128xf32, #tpu.memory_space<vmem>>, vector<1x128xf32>
    %cst_18 = arith.constant dense<0.000000e+00> : vector<128xf32>
    %61 = vector.multi_reduction <add>, %45, %cst_18 [0] : vector<8x128xf32> to vector<128xf32>
    %62 = vector.shape_cast %61 : vector<128xf32> to vector<1x128xf32>
    %63 = arith.addf %60, %62 : vector<1x128xf32>
    %c0_19 = arith.constant 0 : index
    %c0_20 = arith.constant 0 : index
    %64 = vector.load %arg5[%c0_19, %c0_20] : memref<1x128xf32, #tpu.memory_space<vmem>>, vector<1x128xf32>
    tpu.vector_store %arg5[%c0_19, %c0_20], %63 {strides = array<i32>} : memref<1x128xf32, #tpu.memory_space<vmem>>, vector<1x128xf32>,
    %c0_i32_21 = arith.constant 0 : i32
    %65 = arith.cmpi eq, %arg0, %c0_i32_21 : i32
    %66 = arith.extui %65 : i1 to i32
    %c0_i32_22 = arith.constant 0 : i32
    %67 = arith.cmpi ne, %66, %c0_i32_22 : i32
    scf.if %67 {
      %c0_23 = arith.constant 0 : index
      %c0_24 = arith.constant 0 : index
      %68 = vector.load %arg4[%c0_23, %c0_24] : memref<1x128xf32, #tpu.memory_space<vmem>>, vector<1x128xf32>
      %cst_25 = arith.constant dense<0.000000e+00> : vector<1xf32>
      %69 = vector.multi_reduction <add>, %68, %cst_25 [1] : vector<1x128xf32> to vector<1xf32>
      %70 = vector.shape_cast %69 : vector<1xf32> to vector<1x1xf32>
      %c0_26 = arith.constant 0 : index
      %c0_27 = arith.constant 0 : index
      %71 = vector.load %arg5[%c0_26, %c0_27] : memref<1x128xf32, #tpu.memory_space<vmem>>, vector<1x128xf32>
      %cst_28 = arith.constant dense<0.000000e+00> : vector<1xf32>
      %72 = vector.multi_reduction <add>, %71, %cst_28 [1] : vector<1x128xf32> to vector<1xf32>
      %73 = vector.shape_cast %72 : vector<1xf32> to vector<1x1xf32>
      %74 = arith.mulf %70, %73 : vector<1x1xf32>
      %cst_29 = arith.constant 0.000000e+00 : f32
      %75 = vector.broadcast %cst_29 : f32 to vector<1x1xf32>
      %76 = arith.subf %75, %74 : vector<1x1xf32>
      %cst_30 = arith.constant 0.392902285 : f32
      %77 = vector.broadcast %cst_30 : f32 to vector<1x1xf32>
      %78 = arith.mulf %76, %77 : vector<1x1xf32>
      %c0_31 = arith.constant 0 : index
      %c0_32 = arith.constant 0 : index
      %79 = vector.load %arg3[%c0_31, %c0_32] : memref<1x1xf32, #tpu.memory_space<vmem>>, vector<1x1xf32>
      tpu.vector_store %arg3[%c0_31, %c0_32], %78 {strides = array<i32>} : memref<1x1xf32, #tpu.memory_space<vmem>>, vector<1x1xf32>,
    } else {
    }
    return
  }
  func.func @transform_0(%arg0: i32) -> (i32, i32, i32) {
    %c0_i32 = arith.constant 0 : i32
    %c0_i32_0 = arith.constant 0 : i32
    %c0_i32_1 = arith.constant 0 : i32
    return %c0_i32, %arg0, %c0_i32_0 : i32, i32, i32
  }
  func.func @transform_1(%arg0: i32) -> (i32, i32) {
    %c0_i32 = arith.constant 0 : i32
    %c0_i32_0 = arith.constant 0 : i32
    return %arg0, %c0_i32 : i32, i32
  }
  func.func @transform_2(%arg0: i32) -> (i32, i32) {
    %c0_i32 = arith.constant 0 : i32
    %c0_i32_0 = arith.constant 0 : i32
    %c0_i32_1 = arith.constant 0 : i32
    return %c0_i32, %c0_i32_0 : i32, i32
  }
}

</mosaic_0001>

<llo_original>
// kernel: tpu_custom_call.1
$region0: #{tpu_custom_call.1}
  #allocation0 [shape = 'u32[]', space=smem, size = 0x4, offset = 0x4, fixed_abs, tag = 'smem constant byte address 0x4 - core index']
  #allocation1 [shape = 'u32[72,128]{1,0:T(1,128)}', space=vmem, size = 0x9000, scoped, tag = 'internal scratch']
  #allocation2 [shape = 'f32[1,128]{1,0:T(1,128)}', space=vmem, size = 0x200, scoped, tag = 'scratch operand']
  #allocation3 [shape = 'f32[1,128]{1,0:T(1,128)}', space=vmem, size = 0x200, scoped, tag = 'scratch operand']
  %s0 = inlined_call_operand.hbm [shape: f32[4,8,128], index: 0, kind: input, shape index: {}]
  %s1 = inlined_call_operand.hbm [shape: s32[8,128], index: 1, kind: input, shape index: {}]
  %s2 = inlined_call_operand.hbm [shape: f32[1,1], index: 2, kind: output, shape index: {}]
  %s3 = sld [smem:[#allocation0]]
  $region34: #{tpu_custom_call.1} parent=0
    _
  %s5 = ssub.s32 1, %s3
  %s6 = scalar_select 0, %s5, %s3
  $region1: #{tpu_custom_call.1} parent=0
    #allocation4 [shape = 'u8[16384]{0}', space=vmem, size = 0x4000, scoped, tag = 'input window, operand 0, single buffered']
    #allocation5 [shape = 's32[1]{0}', space=sflag, size = 0x4, scoped, tag = 'scoped memory for tpu_custom_call.1']
    #allocation6 [shape = 's32[1]{0}', space=sflag, size = 0x4, scoped, tag = 'scoped memory for tpu_custom_call.1']
    #allocation7 [shape = 'u8[4096]{0}', space=vmem, size = 0x1000, scoped, tag = 'input window, operand 1, single buffered']
    #allocation8 [shape = 's32[1]{0}', space=sflag, size = 0x4, scoped, tag = 'scoped memory for tpu_custom_call.1']
    #allocation9 [shape = 'u8[512]{0}', space=vmem, size = 0x400, scoped, tag = 'output window, operand 0, single buffered']
    %7 = vsyncpa [#allocation5], 0
    %8 = vsyncpa [#allocation8], 0
    %9 = vsyncpa [#allocation6], 0
    // Predicated region
    $region2: #{tpu_custom_call.1} parent=1 // pred_check
      _
    $region3: #{tpu_custom_call.1} parent=1 // pred_check_branch
      %11 = sbr.rel (0) target = $region5
    $region4: #{tpu_custom_call.1} parent=1 // pred_region
      %13 = vsyncadd [#allocation5], 0
      %s14 = sshll.u32 %s0, 4
      %s15 = int_to_ptr.hbm [resolvable:$true] %s14
      %s16 = sshll.u32 [#allocation4], 4
      %s17 = int_to_ptr.vmem [resolvable:$true] %s16
      %22 = dma.hbm_to_vmem [thread:$0]  %s15, 512, %s17, [#allocation5], 128, 128, 8
    $region5: #{tpu_custom_call.1} parent=1 // pred_fallthru
      _
    // Predicated region
    $region6: #{tpu_custom_call.1} parent=1 // pred_check
      _
    $region7: #{tpu_custom_call.1} parent=1 // pred_check_branch
      %24 = sbr.rel (0) target = $region9
    $region8: #{tpu_custom_call.1} parent=1 // pred_region
      %26 = vsyncadd [#allocation8], 0
      %s28 = sshll.u32 %s1, 4
      %s29 = int_to_ptr.hbm [resolvable:$true] %s28
      %s30 = sshll.u32 [#allocation7], 4
      %s31 = int_to_ptr.vmem [resolvable:$true] %s30
      %33 = dma.hbm_to_vmem [thread:$0]  %s29, 128, %s31, [#allocation8]
    $region9: #{tpu_custom_call.1} parent=1 // pred_fallthru
      _
    // Predicated region
    $region10: #{tpu_custom_call.1} parent=1 // pred_check
      _
    $region11: #{tpu_custom_call.1} parent=1 // pred_check_branch
      %35 = sbr.rel (0) target = $region13
    $region12: #{tpu_custom_call.1} parent=1 // pred_region
      %37 = dma.done [#allocation5], 512
    $region13: #{tpu_custom_call.1} parent=1 // pred_fallthru
      _
    // Predicated region
    $region14: #{tpu_custom_call.1} parent=1 // pred_check
      _
    $region15: #{tpu_custom_call.1} parent=1 // pred_check_branch
      %39 = sbr.rel (0) target = $region17
    $region16: #{tpu_custom_call.1} parent=1 // pred_region
      %41 = dma.done [#allocation8], 128
    $region17: #{tpu_custom_call.1} parent=1 // pred_fallthru
      _
    %p42 = scmp.eq.s32.totalorder 0, 0
    // Predicated region
    $region18: #{tpu_custom_call.1} parent=1 // pred_check
      %p43 = pneg %p42
    $region19: #{tpu_custom_call.1} parent=1 // pred_check_branch
      %45 = sbr.rel (%p43) target = $region21
    $region20: #{tpu_custom_call.1} parent=1 // pred_region
      %46 = vst [vmem:[#allocation2] sm:$0x1] 0.0
      %47 = vst [vmem:[#allocation3] sm:$0x1] 0.0
    $region21: #{tpu_custom_call.1} parent=1 // pred_fallthru
      _
    %v48 = vld [vmem:[#allocation4] sm:$0xff]
    %v49 = vld [vmem:[#allocation4 + $0x8] sm:$0xff]
    %v50 = vld [vmem:[#allocation4 + $0x10] sm:$0xff]
    %v51 = vld [vmem:[#allocation4 + $0x18] sm:$0xff]
    %v52 = vld [vmem:[#allocation7] sm:$0xff]
    %v53 = vmax.f32 %v48, %v49
    %v54 = vmax.f32 %v50, %v51
    %v55 = vmax.f32 %v53, %v54
    %v56 = vsub.f32 %v48, %v55
    %v57 = vmul.f32 %v56, 1.442695
    %v58 = vpow.pop %v57
    %v59 = vsub.f32 %v49, %v55
    %v60 = vmul.f32 %v59, 1.442695
    %v61 = vpow.pop %v60
    %v62 = vadd.f32 %v58, %v61
    %v63 = vsub.f32 %v50, %v55
    %v64 = vmul.f32 %v63, 1.442695
    %v65 = vpow.pop %v64
    %v66 = vadd.f32 %v62, %v65
    %v67 = vsub.f32 %v51, %v55
    %v68 = vmul.f32 %v67, 1.442695
    %v69 = vpow.pop %v68
    %v70 = vadd.f32 %v66, %v69
    %v71 = vlog2.pop %v70
    %v72 = vmul.f32 %v71, 0.6931472
    %v73 = vadd.f32 %v55, %v72
    %vm74 = vcmp.eq.s32.totalorder %v52, 0
    %vm75 = vcmp.eq.s32.totalorder %v52, 1
    %vm76 = vcmp.eq.s32.totalorder %v52, 2
    %vm77 = vcmp.eq.s32.totalorder %v52, 3
    %vm78 = vmor %vm74, %vm75
    %vm79 = vmor %vm78, %vm76
    %vm80 = vmor %vm79, %vm77
    %v81 = vsel %vm76, %v50, %v51
    %v82 = vsel %vm75, %v49, %v81
    %v83 = vsel %vm74, %v48, %v82
    %v84 = vsub.f32 %v83, %v73
    %v85 = vsel %vm80, %v84, 0.0
    %v86 = vsel %vm77, 0.025490833, 0.0
    %v87 = vsel %vm76, 0.008839169, %v86
    %v88 = vsel %vm75, 0.0038566415, %v87
    %v89 = vsel %vm74, 0.0015815163, %v88
    %v90 = vld [vmem:[#allocation2] sm:$0x1]
    %v91 = vrot.slane %v89, 4
    %v92 = vadd.f32 %v89, %v91
    %v93 = vrot.slane %v92, 2
    %v94 = vadd.f32 %v92, %v93
    %v95 = vrot.slane %v94, 1
    %v96 = vadd.f32 %v94, %v95
    %v97 = vadd.f32 %v90, %v96
    %98 = vst [vmem:[#allocation2] sm:$0x1] %v97
    %v99 = vld [vmem:[#allocation3] sm:$0x1]
    %v100 = vrot.slane %v85, 4
    %v101 = vadd.f32 %v85, %v100
    %v102 = vrot.slane %v101, 2
    %v103 = vadd.f32 %v101, %v102
    %v104 = vrot.slane %v103, 1
    %v105 = vadd.f32 %v103, %v104
    %v106 = vadd.f32 %v99, %v105
    %107 = vst [vmem:[#allocation3] sm:$0x1] %v106
    // Predicated region
    $region22: #{tpu_custom_call.1} parent=1 // pred_check
      %p108 = pneg %p42
    $region23: #{tpu_custom_call.1} parent=1 // pred_check_branch
      %110 = sbr.rel (%p108) target = $region25
    $region24: #{tpu_custom_call.1} parent=1 // pred_region
      %v111 = vld [vmem:[#allocation2] sm:$0x1]
      %vm112 = vcmask 1040384
      %v113 = vsel %vm112, %v111, 0.0
      %114 = vadd.xlane.f32.xlu0 %v113
      %v115 = vpop.xlane.xlu0 %114
      %v116 = vld [vmem:[#allocation3] sm:$0x1]
      %v117 = vsel %vm112, %v116, 0.0
      %118 = vadd.xlane.f32.xlu0 %v117
      %v119 = vpop.xlane.xlu0 %118
      %v120 = vmul.f32 %v115, %v119
      %v121 = vsub.f32 0.0, %v120
      %v122 = vmul.f32 %v121, 0.39290228
      %vm123 = vcmask 0
      %124 = vst.msk [vmem:[#allocation9] sm:$0x1] %vm123, %v122
    $region25: #{tpu_custom_call.1} parent=1 // pred_fallthru
      _
    // Predicated region
    $region26: #{tpu_custom_call.1} parent=1 // pred_check
      _
    $region27: #{tpu_custom_call.1} parent=1 // pred_check_branch
      %126 = sbr.rel (0) target = $region29
    $region28: #{tpu_custom_call.1} parent=1 // pred_region
      %128 = vsyncadd [#allocation6], 0
      %s130 = sshll.u32 [#allocation9], 4
      %s131 = int_to_ptr.vmem [resolvable:$true] %s130
      %s132 = sshll.u32 %s2, 4
      %s133 = int_to_ptr.hbm [resolvable:$true] %s132
      %135 = dma.vmem_to_hbm [thread:$0]  %s131, 16, %s133, [#allocation6]
    $region29: #{tpu_custom_call.1} parent=1 // pred_fallthru
      _
    // Predicated region
    $region30: #{tpu_custom_call.1} parent=1 // pred_check
      _
    $region31: #{tpu_custom_call.1} parent=1 // pred_check_branch
      %137 = sbr.rel (0) target = $region33
    $region32: #{tpu_custom_call.1} parent=1 // pred_region
      %139 = dma.done [#allocation6], 16
    $region33: #{tpu_custom_call.1} parent=1 // pred_fallthru
      _
    %140 = vsyncpa [#allocation5], 1
    %141 = vsyncpa [#allocation8], 1
    %142 = vsyncpa [#allocation6], 1

</llo_original>
